<compile_context>
chip_gen: v7x
topology: tpu7x:2x2x1
jax: 0.10.0
libtpu: 0.0.40
codegen_flags: <defaults>
</compile_context>

<pallas_src>
import functools

import jax
import jax.numpy as jnp
from jax.experimental import pallas as pl
from jax.experimental.pallas import tpu as pltpu


_LANE = 128           # vreg lane width
_CHUNK = 256          # K-dim chunk for the wide-W path (matches the 256-wide MXU)
_GROUPED_MAX_W = 256  # widths <= this use the single-matmul grouped path


def _grouped_kernel(x_ref, m_ref, o_ref):
    # x_ref: (Rb, g*W)      g whole image rows packed along the lane axis
    # m_ref: (g*W, 4*g*W)   kron(I_g, [A|A]), A = kron(I_W, [1,1]); exact 0/1 entries
    # o_ref: (Rb, 4*g*W)    duplicated output rows, already in final memory layout
    y = jnp.dot(x_ref[...], m_ref[...], preferred_element_type=jnp.float32)
    o_ref[...] = y.astype(o_ref.dtype)


def _chunked_kernel(x_ref, r_ref, o_ref, *, width, chunk):
    # x_ref: (Rb, W); r_ref: (chunk, 2*chunk) = kron(I_chunk, [1,1]); o_ref: (Rb, 4W)
    two_w = 2 * width
    for c in range(0, width, chunk):       # static trip count
        wc = min(chunk, width - c)
        y = jnp.dot(x_ref[:, c:c + wc], r_ref[:wc, :2 * wc],
                    preferred_element_type=jnp.float32).astype(o_ref.dtype)
        o_ref[:, 2 * c:2 * c + 2 * wc] = y                      # output row 2i copy
        o_ref[:, two_w + 2 * c:two_w + 2 * c + 2 * wc] = y      # output row 2i+1 copy


def _choose_row_block(num_rows, out_width, itemsize):
    """Rows of the flattened view per grid step (~4 MiB output block, >= ~8 steps)."""
    sub = max(8, 32 // itemsize)                 # sublane pack: 8 f32, 16 bf16, 32 int8
    if num_rows <= sub:
        return num_rows
    target = max(1, (4 << 20) // (out_width * itemsize))   # ~4 MiB output per step
    target = min(target, pl.cdiv(num_rows, 8))             # keep pipeline depth
    target = max(sub, (target // sub) * sub)
    target = min(target, num_rows)
    rb = target
    while rb > sub and num_rows % rb:            # prefer no ragged trailing block
        rb -= sub
    if num_rows % rb:
        rb = target                              # Pallas masks the ragged last block
    return rb


def upsample2x(x):
    """Nearest-neighbour 2x upsample of an NCHW tensor via a Pallas TPU kernel."""
    N, C, H, W = x.shape
    dtype = x.dtype

    if not jnp.issubdtype(dtype, jnp.floating):
        # TODO(synk): dtype-preserving integer lane-interleave kernel (v7x MXU has no
        # integer mode); fall back to XLA for integer/bool masks.
        return jnp.repeat(jnp.repeat(x, 2, axis=2), 2, axis=3)

    P = N * C * H                     # flattened (n, c, h) rows
    itemsize = jnp.dtype(dtype).itemsize
    # The module's registered buffer is ones(2, 2); its first row [1, 1] drives the
    # column duplication, the second row duplicate is a free memory-layout identity.
    dup_row = jnp.ones((1, 2), dtype=dtype)

    if W <= _GROUPED_MAX_W:
        # Pack g whole rows per kernel row so blocks stay lane-dense even for small W.
        g = max(1, -(-_LANE // W))    # ceil(128 / W)
        while P % g:                  # g must divide the flattened row count
            g -= 1
        wg = g * W
        a = jnp.kron(jnp.eye(W, dtype=dtype), dup_row)      # (W, 2W), exact 0/1
        b = jnp.concatenate([a, a], axis=1)                  # (W, 4W)
        mat = jnp.kron(jnp.eye(g, dtype=dtype), b)           # (gW, 4gW)
        rows, in_w, out_w = P // g, wg, 4 * wg
        kernel = _grouped_kernel
    else:
        mat = jnp.kron(jnp.eye(_CHUNK, dtype=dtype), dup_row)  # (256, 512), fixed size
        rows, in_w, out_w = P, W, 4 * W
        kernel = functools.partial(_chunked_kernel, width=W, chunk=_CHUNK)

    x_flat = x.reshape(rows, in_w)
    rb = _choose_row_block(rows, out_w, itemsize)

    out_flat = pl.pallas_call(
        kernel,
        out_shape=jax.ShapeDtypeStruct((rows, out_w), dtype),
        grid_spec=pltpu.PrefetchScalarGridSpec(
            num_scalar_prefetch=0,
            grid=(pl.cdiv(rows, rb),),
            in_specs=[
                pl.BlockSpec((rb, in_w), lambda i: (i, 0)),
                # Constant block index: the small 0/1 matrix is DMA'd once per core.
                pl.BlockSpec(mat.shape, lambda i: (0, 0)),
            ],
            out_specs=pl.BlockSpec((rb, out_w), lambda i: (i, 0)),
        ),
        compiler_params=pltpu.CompilerParams(
            dimension_semantics=("parallel",),
            vmem_limit_bytes=32 * 1024 * 1024,
        ),
        cost_estimate=pl.CostEstimate(
            flops=0, transcendentals=0,
            bytes_accessed=5 * P * W * itemsize),   # read x once, write 4x
    )(x_flat, mat)

    # (rows, out_w) -> (N, C, 2H, 2W) is a pure row-major reinterpretation.
    return out_flat.reshape(N, C, 2 * H, 2 * W)


if __name__ == "__main__":
    key = jax.random.PRNGKey(0)
    k1, k2 = jax.random.split(key)

    # Primary check: typical small NCHW shape (small-W grouped path, W=16 -> g=8).
    x = jax.random.normal(k1, (2, 4, 16, 16), dtype=jnp.float32)
    out = jax.block_until_ready(upsample2x(x))
    ref = jnp.repeat(jnp.repeat(x, 2, axis=2), 2, axis=3)
    assert out.shape == (2, 4, 32, 32), out.shape
    assert out.dtype == x.dtype, out.dtype
    assert jnp.allclose(out, ref, atol=1e-6), "grouped-path mismatch vs reference"

    # Secondary check: wide-W chunked path (fixed 256-wide interleave + remainder).
    x2 = jax.random.normal(k2, (1, 2, 8, 320), dtype=jnp.float32)
    out2 = jax.block_until_ready(upsample2x(x2))
    ref2 = jnp.repeat(jnp.repeat(x2, 2, axis=2), 2, axis=3)
    assert out2.shape == (1, 2, 16, 640), out2.shape
    assert jnp.allclose(out2, ref2, atol=1e-6), "chunked-path mismatch vs reference"

    print("KERNEL_OK")
</pallas_src>

<mosaic_0001>
module attributes {stable_mosaic.version = 11 : i64} {
  func.func @_grouped_kernel(%arg0: i32, %arg1: memref<8x128xf32, #tpu.memory_space<vmem>>, %arg2: memref<128x512xf32, #tpu.memory_space<vmem>>, %arg3: memref<8x512xf32, #tpu.memory_space<vmem>>) attributes {dimension_semantics = [#tpu.dimension_semantics<parallel>], iteration_bounds = array<i64: 2>, scalar_prefetch = 0 : i64, scratch_operands = 0 : i64, tpu.core_type = #tpu.core_type<tc>, window_params = [{transform_indices = @transform_0, window_bounds = array<i64: 8, 128>}, {pipeline_mode = #tpu.pipeline_mode<synchronous>, transform_indices = @transform_1, window_bounds = array<i64: 128, 512>}, {transform_indices = @transform_2, window_bounds = array<i64: 8, 512>}]} {
    %c0 = arith.constant 0 : index
    %c0_0 = arith.constant 0 : index
    %0 = vector.load %arg1[%c0, %c0_0] : memref<8x128xf32, #tpu.memory_space<vmem>>, vector<8x128xf32>
    %c0_1 = arith.constant 0 : index
    %c0_2 = arith.constant 0 : index
    %1 = vector.load %arg2[%c0_1, %c0_2] : memref<128x512xf32, #tpu.memory_space<vmem>>, vector<128x512xf32>
    %cst = arith.constant dense<0.000000e+00> : vector<8x512xf32>
    %2 = tpu.matmul %0, %1, %cst {dimension_numbers = #tpu.dot_dimension_numbers<[1], [0], [0], [1], [0, 0, 1, 1], [], []>} : vector<8x128xf32>, vector<128x512xf32>, vector<8x512xf32> -> vector<8x512xf32>
    %c0_3 = arith.constant 0 : index
    %c0_4 = arith.constant 0 : index
    %3 = vector.load %arg3[%c0_3, %c0_4] : memref<8x512xf32, #tpu.memory_space<vmem>>, vector<8x512xf32>
    tpu.vector_store %arg3[%c0_3, %c0_4], %2 {strides = array<i32>} : memref<8x512xf32, #tpu.memory_space<vmem>>, vector<8x512xf32>,
    return
  }
  func.func @transform_0(%arg0: i32) -> (i32, i32) {
    %c0_i32 = arith.constant 0 : i32
    %c0_i32_0 = arith.constant 0 : i32
    return %arg0, %c0_i32 : i32, i32
  }
  func.func @transform_1(%arg0: i32) -> (i32, i32) {
    %c0_i32 = arith.constant 0 : i32
    %c0_i32_0 = arith.constant 0 : i32
    %c0_i32_1 = arith.constant 0 : i32
    return %c0_i32, %c0_i32_0 : i32, i32
  }
  func.func @transform_2(%arg0: i32) -> (i32, i32) {
    %c0_i32 = arith.constant 0 : i32
    %c0_i32_0 = arith.constant 0 : i32
    return %arg0, %c0_i32 : i32, i32
  }
}

</mosaic_0001>

<llo_original>
// kernel: tpu_custom_call.1
$region0: #{tpu_custom_call.1}
  #allocation0 [shape = 'u32[]', space=smem, size = 0x4, offset = 0x4, fixed_abs, tag = 'smem constant byte address 0x4 - core index']
  #allocation1 [shape = 'u32[144,128]{1,0:T(1,128)}', space=vmem, size = 0x12000, scoped, tag = 'internal scratch']
  %s0 = inlined_call_operand.hbm [shape: f32[16,128], index: 0, kind: input, shape index: {}]
  %s1 = inlined_call_operand.hbm [shape: f32[128,512], index: 1, kind: input, shape index: {}]
  %s2 = inlined_call_operand.hbm [shape: f32[16,512], index: 2, kind: output, shape index: {}]
  %s3 = sld [smem:[#allocation0]]
  $region49: #{tpu_custom_call.1} parent=0
    _
  %s5 = ssub.s32 1, %s3
  %s6 = scalar_select 0, %s5, %s3
  $region1: #{tpu_custom_call.1} parent=0
    #allocation2 [shape = 'u8[8192]{0}', space=vmem, size = 0x2000, scoped, tag = 'input window, operand 0']
    #allocation3 [shape = 's32[2]{0}', space=sflag, size = 0x8, scoped, tag = 'scoped memory for tpu_custom_call.1']
    #allocation4 [shape = 's32[2]{0}', space=sflag, size = 0x8, scoped, tag = 'scoped memory for tpu_custom_call.1']
    #allocation5 [shape = 'u8[262144]{0}', space=vmem, size = 0x40000, scoped, tag = 'input window, operand 1, single buffered']
    #allocation6 [shape = 's32[1]{0}', space=sflag, size = 0x4, scoped, tag = 'scoped memory for tpu_custom_call.1']
    #allocation7 [shape = 'u8[32768]{0}', space=vmem, size = 0x8000, scoped, tag = 'output window, operand 0']
    %7 = vsyncpa [#allocation3], 0
    %s8 = scalar_lea.sflag [#allocation3], 1
    %9 = vsyncpa %s8, 0
    %10 = vsyncpa [#allocation6], 0
    %11 = vsyncpa [#allocation4], 0
    %s12 = scalar_lea.sflag [#allocation4], 1
    %13 = vsyncpa %s12, 0
    loop: start=0, step=1, limit=4
    $region2: #{tpu_custom_call.1} parent=1 // loop_pre_header
      _
    $region3: #{tpu_custom_call.1} parent=1 // loop_header
      %s15 = sphi 0, %s19
      %p16 = scmp.ge.s32.totalorder %s15, 4
      %s25 = sphi 0, %s27
      %s28 = sphi 0, %s25
      %s29 = sphi 0, %s28
      %s45 = sphi 0, %s29
      %s49 = sphi 0, %s49
      %s51 = sphi 0, %s49
      %s52 = sphi 0, %s51
      %s66 = sphi 0, %s52
      %s72 = sphi 0, %s74
      %s75 = sphi 0, %s72
      %s76 = sphi 0, %s75
      %s92 = sphi 0, %s76
    $region4: #{tpu_custom_call.1} parent=1 // loop_header_branch
      %18 = sbr.rel (%p16) target = $region8
    $region5: #{tpu_custom_call.1} parent=1 // loop_body
      %s20 = ssub.s32 %s15, 1
      %s21 = ssub.s32 %s15, 2
      %s22 = sadd.s32 %s15, 1
      %s23 = ssub.s32 %s15, %s22
      %p24 = scmp.eq.s32.totalorder %s23, 0
      %s26 = sadd.s32 %s25, 1
      %s27 = scalar_select %p24, %s25, %s26
      %p30 = pneg %p24
      %p31 = scmp.eq.s32.totalorder %s15, 1
      %p32 = por %p30, %p31
      %p33 = scmp.ne.s32.totalorder %s25, %s28
      %p34 = scmp.eq.s32.totalorder %s15, 0
      %p35 = por %p33, %p34
      %p36 = scmp.ne.s32.totalorder %s25, %s28
      %p37 = scmp.eq.s32.totalorder %s20, 1
      %p38 = por %p36, %p37
      %p39 = scmp.ne.s32.totalorder %s28, %s29
      %p40 = scmp.eq.s32.totalorder %s20, 0
      %p41 = por %p39, %p40
      %p42 = scmp.ne.s32.totalorder %s28, %s29
      %p43 = scmp.eq.s32.totalorder %s21, 1
      %p44 = por %p42, %p43
      %p46 = scmp.ne.s32.totalorder %s29, %s45
      %p47 = scmp.eq.s32.totalorder %s21, 0
      %p48 = por %p46, %p47
      %s50 = sadd.s32 %s49, 1
      %p53 = scmp.eq.s32.totalorder %s15, 1
      %p54 = scmp.ne.s32.totalorder %s49, %s51
      %p55 = scmp.eq.s32.totalorder %s15, 0
      %p56 = por %p54, %p55
      %p57 = scmp.ne.s32.totalorder %s49, %s51
      %p58 = scmp.eq.s32.totalorder %s20, 1
      %p59 = por %p57, %p58
      %p60 = scmp.ne.s32.totalorder %s51, %s52
      %p61 = scmp.eq.s32.totalorder %s20, 0
      %p62 = por %p60, %p61
      %p63 = scmp.ne.s32.totalorder %s51, %s52
      %p64 = scmp.eq.s32.totalorder %s21, 1
      %p65 = por %p63, %p64
      %p67 = scmp.ne.s32.totalorder %s52, %s66
      %p68 = scmp.eq.s32.totalorder %s21, 0
      %p69 = por %p67, %p68
      %s70 = ssub.s32 %s15, %s22
      %p71 = scmp.eq.s32.totalorder %s70, 0
      %s73 = sadd.s32 %s72, 1
      %s74 = scalar_select %p71, %s72, %s73
      %p77 = pneg %p71
      %p78 = scmp.eq.s32.totalorder %s15, 1
      %p79 = por %p77, %p78
      %p80 = scmp.ne.s32.totalorder %s72, %s75
      %p81 = scmp.eq.s32.totalorder %s15, 0
      %p82 = por %p80, %p81
      %p83 = scmp.ne.s32.totalorder %s72, %s75
      %p84 = scmp.eq.s32.totalorder %s20, 1
      %p85 = por %p83, %p84
      %p86 = scmp.ne.s32.totalorder %s75, %s76
      %p87 = scmp.eq.s32.totalorder %s20, 0
      %p88 = por %p86, %p87
      %p89 = scmp.ne.s32.totalorder %s75, %s76
      %p90 = scmp.eq.s32.totalorder %s21, 1
      %p91 = por %p89, %p90
      %p93 = scmp.ne.s32.totalorder %s76, %s92
      %p94 = scmp.eq.s32.totalorder %s21, 0
      %p95 = por %p93, %p94
      %p96 = scmp.le.s32.totalorder 1, %s15
      %p97 = scmp.lt.s32.totalorder %s15, 3
      %p98 = pnand %p96, %p97
      %p99 = pneg %p98
      // Predicated region
      $region9: #{tpu_custom_call.1} parent=5 // pred_check
        _
      $region10: #{tpu_custom_call.1} parent=5 // pred_check_branch
        %101 = sbr.rel (%p98) target = $region12
      $region11: #{tpu_custom_call.1} parent=5 // pred_region
        %s102 = ssub.s32 %s15, 1
        // Predicated region
        $region13: #{tpu_custom_call.1} parent=11 // pred_check
          %p103 = pneg %p62
        $region14: #{tpu_custom_call.1} parent=11 // pred_check_branch
          %105 = sbr.rel (%p103) target = $region16
        $region15: #{tpu_custom_call.1} parent=11 // pred_region
          %s107 = ssub.s32 8192, 8192
          %108 = vsyncadd [#allocation6], %s107
          %s109 = sshll.u32 [#allocation5], 4
          %s110 = int_to_ptr.vmem [resolvable:$true] %s109
          %115 = dma.hbm_to_vmem [thread:$0]  %s1, 8192, %s110, [#allocation6], 512, 512, 32
        $region16: #{tpu_custom_call.1} parent=11 // pred_fallthru
          _
      $region12: #{tpu_custom_call.1} parent=5 // pred_fallthru
        _
      %p116 = scmp.lt.s32.totalorder %s15, 2
      // Predicated region
      $region17: #{tpu_custom_call.1} parent=5 // pred_check
        %p117 = pneg %p116
      $region18: #{tpu_custom_call.1} parent=5 // pred_check_branch
        %119 = sbr.rel (%p117) target = $region20
      $region19: #{tpu_custom_call.1} parent=5 // pred_region
        // Predicated region
        $region21: #{tpu_custom_call.1} parent=19 // pred_check
          %p120 = pneg %p35
        $region22: #{tpu_custom_call.1} parent=19 // pred_check_branch
          %122 = sbr.rel (%p120) target = $region24
        $region23: #{tpu_custom_call.1} parent=19 // pred_region
          %s123 = sand.u32 %s25, 1
          %s124 = scalar_lea.sflag [#allocation3], %s123
          %s125 = sand.u32 %s25, 1
          %s126 = smul.addr %s125, 8
          %s127 = scalar_lea.vmem [#allocation2], %s126
          %s129 = ssub.s32 128, 128
          %130 = vsyncadd %s124, %s129
          %s131 = smul.addr %s15, 128
          %s132 = scalar_lea.hbm %s0, %s131
          %s134 = sshll.u32 %s127, 4
          %s135 = int_to_ptr.vmem [resolvable:$true] %s134
          %137 = dma.hbm_to_vmem [thread:$0]  %s132, 128, %s135, %s124
        $region24: #{tpu_custom_call.1} parent=19 // pred_fallthru
          _
      $region20: #{tpu_custom_call.1} parent=5 // pred_fallthru
        _
      %p138 = scmp.le.s32.totalorder 1, %s15
      %p139 = scmp.lt.s32.totalorder %s15, 3
      %p140 = pnand %p138, %p139
      %p141 = pneg %p140
      // Predicated region
      $region25: #{tpu_custom_call.1} parent=5 // pred_check
        _
      $region26: #{tpu_custom_call.1} parent=5 // pred_check_branch
        %143 = sbr.rel (%p140) target = $region28
      $region27: #{tpu_custom_call.1} parent=5 // pred_region
        %s144 = ssub.s32 %s15, 1
        %s145 = sand.u32 %s28, 1
        %s146 = scalar_lea.sflag [#allocation3], %s145
        %s147 = sand.u32 %s28, 1
        %s148 = smul.addr %s147, 8
        %s149 = scalar_lea.vmem [#allocation2], %s148
        // Predicated region
        $region29: #{tpu_custom_call.1} parent=27 // pred_check
          %p150 = pneg %p41
        $region30: #{tpu_custom_call.1} parent=27 // pred_check_branch
          %152 = sbr.rel (%p150) target = $region32
        $region31: #{tpu_custom_call.1} parent=27 // pred_region
          %153 = dma.done %s146, 128
        $region32: #{tpu_custom_call.1} parent=27 // pred_fallthru
          _
        // Predicated region
        $region33: #{tpu_custom_call.1} parent=27 // pred_check
          %p154 = pneg %p62
        $region34: #{tpu_custom_call.1} parent=27 // pred_check_branch
          %156 = sbr.rel (%p154) target = $region36
        $region35: #{tpu_custom_call.1} parent=27 // pred_region
          %157 = dma.done [#allocation6], 8192
        $region36: #{tpu_custom_call.1} parent=27 // pred_fallthru
          _
        %s158 = sand.u32 %s28, 1
        %s159 = scalar_lea.sflag [#allocation3], %s158
        %s160 = sand.u32 %s28, 1
        %s161 = smul.addr %s160, 8
        %s162 = scalar_lea.vmem [#allocation2], %s161
        %p163 = pneg %p41
        %p164 = pneg %p38
        %p165 = pneg %p62
        %p166 = pneg %p59
        %p167 = pneg %p88
        %p168 = pneg %p85
        %s169 = sand.u32 %s75, 1
        %s170 = scalar_lea.sflag [#allocation4], %s169
        %s171 = sand.u32 %s75, 1
        %s172 = smul.addr %s171, 32
        %s173 = scalar_lea.vmem [#allocation7], %s172
        %v174 = vld [vmem:[%s149] sm:$0xff]
        %v175 = vld [vmem:[#allocation5] sm:$0xff]
        %v176 = vld [vmem:[#allocation5 + $0x8] sm:$0xff]
        %v177 = vld [vmem:[#allocation5 + $0x10] sm:$0xff]
        %v178 = vld [vmem:[#allocation5 + $0x18] sm:$0xff]
        %v179 = vld [vmem:[#allocation5 + $0x20] sm:$0xff]
        %v180 = vld [vmem:[#allocation5 + $0x28] sm:$0xff]
        %v181 = vld [vmem:[#allocation5 + $0x30] sm:$0xff]
        %v182 = vld [vmem:[#allocation5 + $0x38] sm:$0xff]
        %v183 = vld [vmem:[#allocation5 + $0x40] sm:$0xff]
        %v184 = vld [vmem:[#allocation5 + $0x48] sm:$0xff]
        %v185 = vld [vmem:[#allocation5 + $0x50] sm:$0xff]
        %v186 = vld [vmem:[#allocation5 + $0x58] sm:$0xff]
        %v187 = vld [vmem:[#allocation5 + $0x60] sm:$0xff]
        %v188 = vld [vmem:[#allocation5 + $0x68] sm:$0xff]
        %v189 = vld [vmem:[#allocation5 + $0x70] sm:$0xff]
        %v190 = vld [vmem:[#allocation5 + $0x78] sm:$0xff]
        %v191 = vld [vmem:[#allocation5 + $0x80] sm:$0xff]
        %v192 = vld [vmem:[#allocation5 + $0x88] sm:$0xff]
        %v193 = vld [vmem:[#allocation5 + $0x90] sm:$0xff]
        %v194 = vld [vmem:[#allocation5 + $0x98] sm:$0xff]
        %v195 = vld [vmem:[#allocation5 + $0xa0] sm:$0xff]
        %v196 = vld [vmem:[#allocation5 + $0xa8] sm:$0xff]
        %v197 = vld [vmem:[#allocation5 + $0xb0] sm:$0xff]
        %v198 = vld [vmem:[#allocation5 + $0xb8] sm:$0xff]
        %v199 = vld [vmem:[#allocation5 + $0xc0] sm:$0xff]
        %v200 = vld [vmem:[#allocation5 + $0xc8] sm:$0xff]
        %v201 = vld [vmem:[#allocation5 + $0xd0] sm:$0xff]
        %v202 = vld [vmem:[#allocation5 + $0xd8] sm:$0xff]
        %v203 = vld [vmem:[#allocation5 + $0xe0] sm:$0xff]
        %v204 = vld [vmem:[#allocation5 + $0xe8] sm:$0xff]
        %v205 = vld [vmem:[#allocation5 + $0xf0] sm:$0xff]
        %v206 = vld [vmem:[#allocation5 + $0xf8] sm:$0xff]
        %v207 = vld [vmem:[#allocation5 + $0x100] sm:$0xff]
        %v208 = vld [vmem:[#allocation5 + $0x108] sm:$0xff]
        %v209 = vld [vmem:[#allocation5 + $0x110] sm:$0xff]
        %v210 = vld [vmem:[#allocation5 + $0x118] sm:$0xff]
        %v211 = vld [vmem:[#allocation5 + $0x120] sm:$0xff]
        %v212 = vld [vmem:[#allocation5 + $0x128] sm:$0xff]
        %v213 = vld [vmem:[#allocation5 + $0x130] sm:$0xff]
        %v214 = vld [vmem:[#allocation5 + $0x138] sm:$0xff]
        %v215 = vld [vmem:[#allocation5 + $0x140] sm:$0xff]
        %v216 = vld [vmem:[#allocation5 + $0x148] sm:$0xff]
        %v217 = vld [vmem:[#allocation5 + $0x150] sm:$0xff]
        %v218 = vld [vmem:[#allocation5 + $0x158] sm:$0xff]
        %v219 = vld [vmem:[#allocation5 + $0x160] sm:$0xff]
        %v220 = vld [vmem:[#allocation5 + $0x168] sm:$0xff]
        %v221 = vld [vmem:[#allocation5 + $0x170] sm:$0xff]
        %v222 = vld [vmem:[#allocation5 + $0x178] sm:$0xff]
        %v223 = vld [vmem:[#allocation5 + $0x180] sm:$0xff]
        %v224 = vld [vmem:[#allocation5 + $0x188] sm:$0xff]
        %v225 = vld [vmem:[#allocation5 + $0x190] sm:$0xff]
        %v226 = vld [vmem:[#allocation5 + $0x198] sm:$0xff]
        %v227 = vld [vmem:[#allocation5 + $0x1a0] sm:$0xff]
        %v228 = vld [vmem:[#allocation5 + $0x1a8] sm:$0xff]
        %v229 = vld [vmem:[#allocation5 + $0x1b0] sm:$0xff]
        %v230 = vld [vmem:[#allocation5 + $0x1b8] sm:$0xff]
        %v231 = vld [vmem:[#allocation5 + $0x1c0] sm:$0xff]
        %v232 = vld [vmem:[#allocation5 + $0x1c8] sm:$0xff]
        %v233 = vld [vmem:[#allocation5 + $0x1d0] sm:$0xff]
        %v234 = vld [vmem:[#allocation5 + $0x1d8] sm:$0xff]
        %v235 = vld [vmem:[#allocation5 + $0x1e0] sm:$0xff]
        %v236 = vld [vmem:[#allocation5 + $0x1e8] sm:$0xff]
        %v237 = vld [vmem:[#allocation5 + $0x1f0] sm:$0xff]
        %v238 = vld [vmem:[#allocation5 + $0x1f8] sm:$0xff]
        %239 = vmatprep.subr.mxu0 %v176
        %240 = vmatpush1.msra.mxu0 %v175
        %241 = vmatprep.subr.mxu0 %v180
        %242 = vmatpush1.msra.mxu0 %v179
        %243 = vmatprep.subr.mxu0 %v184
        %244 = vmatpush1.msra.mxu0 %v183
        %245 = vmatprep.subr.mxu0 %v188
        %246 = vmatpush1.msra.mxu0 %v187
        %247 = vmatprep.subr.mxu0 %v192
        %248 = vmatpush1.msra.mxu0 %v191
        %249 = vmatprep.subr.mxu0 %v196
        %250 = vmatpush1.msra.mxu0 %v195
        %251 = vmatprep.subr.mxu0 %v200
        %252 = vmatpush1.msra.mxu0 %v199
        %253 = vmatprep.subr.mxu0 %v204
        %254 = vmatpush1.msra.mxu0 %v203
        %255 = vmatprep.subr.mxu0 %v208
        %256 = vmatpush1.msra.mxu0 %v207
        %257 = vmatprep.subr.mxu0 %v212
        %258 = vmatpush1.msra.mxu0 %v211
        %259 = vmatprep.subr.mxu0 %v216
        %260 = vmatpush1.msra.mxu0 %v215
        %261 = vmatprep.subr.mxu0 %v220
        %262 = vmatpush1.msra.mxu0 %v219
        %263 = vmatprep.subr.mxu0 %v224
        %264 = vmatpush1.msra.mxu0 %v223
        %265 = vmatprep.subr.mxu0 %v228
        %266 = vmatpush1.msra.mxu0 %v227
        %267 = vmatprep.subr.mxu0 %v232
        %268 = vmatpush1.msra.mxu0 %v231
        %269 = vmatprep.subr.mxu0 %v236
        %270 = vmatpush1.msra.mxu0 %v235
        %271 = vmatprep.subr.mxu0 0.0
        %272 = vmatpush1.msra.mxu0 0.0
        %273 = vmatprep.subr.mxu0 0.0
        %274 = vmatpush1.msra.mxu0 0.0
        %275 = vmatprep.subr.mxu0 0.0
        %276 = vmatpush1.msra.mxu0 0.0
        %277 = vmatprep.subr.mxu0 0.0
        %278 = vmatpush1.msra.mxu0 0.0
        %279 = vmatprep.subr.mxu0 0.0
        %280 = vmatpush1.msra.mxu0 0.0
        %281 = vmatprep.subr.mxu0 0.0
        %282 = vmatpush1.msra.mxu0 0.0
        %283 = vmatprep.subr.mxu0 0.0
        %284 = vmatpush1.msra.mxu0 0.0
        %285 = vmatprep.subr.mxu0 0.0
        %286 = vmatpush1.msra.mxu0 0.0
        %287 = vmatprep.subr.mxu0 0.0
        %288 = vmatpush1.msra.mxu0 0.0
        %289 = vmatprep.subr.mxu0 0.0
        %290 = vmatpush1.msra.mxu0 0.0
        %291 = vmatprep.subr.mxu0 0.0
        %292 = vmatpush1.msra.mxu0 0.0
        %293 = vmatprep.subr.mxu0 0.0
        %294 = vmatpush1.msra.mxu0 0.0
        %295 = vmatprep.subr.mxu0 0.0
        %296 = vmatpush1.msra.mxu0 0.0
        %297 = vmatprep.subr.mxu0 0.0
        %298 = vmatpush1.msra.mxu0 0.0
        %299 = vmatprep.subr.mxu0 0.0
        %300 = vmatpush1.msra.mxu0 0.0
        %301 = vmatprep.subr.mxu0 0.0
        %302 = vmatpush1.msra.mxu0 0.0
        %303 = vmatprep.mubr.f32.mxu0 0.0
        %304 = vmatmul.mubr.f32.gmra.mrb[0].mxu0 %v174
        %v305 = vpop.f32.mrb[0].mxu0
        %v306 = vadd.f32 0.0, %v305
        %v307 = vpop.f32.mrb[0].mxu0
        %v308 = vadd.f32 0.0, %v307
        %309 = vdwg.mxu0
        %310 = vmatprep.subr.mxu0 %v178
        %311 = vmatpush1.msra.mxu0 %v177
        %312 = vmatprep.subr.mxu0 %v182
        %313 = vmatpush1.msra.mxu0 %v181
        %314 = vmatprep.subr.mxu0 %v186
        %315 = vmatpush1.msra.mxu0 %v185
        %316 = vmatprep.subr.mxu0 %v190
        %317 = vmatpush1.msra.mxu0 %v189
        %318 = vmatprep.subr.mxu0 %v194
        %319 = vmatpush1.msra.mxu0 %v193
        %320 = vmatprep.subr.mxu0 %v198
        %321 = vmatpush1.msra.mxu0 %v197
        %322 = vmatprep.subr.mxu0 %v202
        %323 = vmatpush1.msra.mxu0 %v201
        %324 = vmatprep.subr.mxu0 %v206
        %325 = vmatpush1.msra.mxu0 %v205
        %326 = vmatprep.subr.mxu0 %v210
        %327 = vmatpush1.msra.mxu0 %v209
        %328 = vmatprep.subr.mxu0 %v214
        %329 = vmatpush1.msra.mxu0 %v213
        %330 = vmatprep.subr.mxu0 %v218
        %331 = vmatpush1.msra.mxu0 %v217
        %332 = vmatprep.subr.mxu0 %v222
        %333 = vmatpush1.msra.mxu0 %v221
        %334 = vmatprep.subr.mxu0 %v226
        %335 = vmatpush1.msra.mxu0 %v225
        %336 = vmatprep.subr.mxu0 %v230
        %337 = vmatpush1.msra.mxu0 %v229
        %338 = vmatprep.subr.mxu0 %v234
        %339 = vmatpush1.msra.mxu0 %v233
        %340 = vmatprep.subr.mxu0 %v238
        %341 = vmatpush1.msra.mxu0 %v237
        %342 = vmatprep.subr.mxu0 0.0
        %343 = vmatpush1.msra.mxu0 0.0
        %344 = vmatprep.subr.mxu0 0.0
        %345 = vmatpush1.msra.mxu0 0.0
        %346 = vmatprep.subr.mxu0 0.0
        %347 = vmatpush1.msra.mxu0 0.0
        %348 = vmatprep.subr.mxu0 0.0
        %349 = vmatpush1.msra.mxu0 0.0
        %350 = vmatprep.subr.mxu0 0.0
        %351 = vmatpush1.msra.mxu0 0.0
        %352 = vmatprep.subr.mxu0 0.0
        %353 = vmatpush1.msra.mxu0 0.0
        %354 = vmatprep.subr.mxu0 0.0
        %355 = vmatpush1.msra.mxu0 0.0
        %356 = vmatprep.subr.mxu0 0.0
        %357 = vmatpush1.msra.mxu0 0.0
        %358 = vmatprep.subr.mxu0 0.0
        %359 = vmatpush1.msra.mxu0 0.0
        %360 = vmatprep.subr.mxu0 0.0
        %361 = vmatpush1.msra.mxu0 0.0
        %362 = vmatprep.subr.mxu0 0.0
        %363 = vmatpush1.msra.mxu0 0.0
        %364 = vmatprep.subr.mxu0 0.0
        %365 = vmatpush1.msra.mxu0 0.0
        %366 = vmatprep.subr.mxu0 0.0
        %367 = vmatpush1.msra.mxu0 0.0
        %368 = vmatprep.subr.mxu0 0.0
        %369 = vmatpush1.msra.mxu0 0.0
        %370 = vmatprep.subr.mxu0 0.0
        %371 = vmatpush1.msra.mxu0 0.0
        %372 = vmatprep.subr.mxu0 0.0
        %373 = vmatpush1.msra.mxu0 0.0
        %374 = vmatprep.mubr.f32.mxu0 0.0
        %375 = vmatmul.mubr.f32.gmra.mrb[0].mxu0 %v174
        %v376 = vpop.f32.mrb[0].mxu0
        %v377 = vadd.f32 0.0, %v376
        %v378 = vpop.f32.mrb[0].mxu0
        %v379 = vadd.f32 0.0, %v378
        %380 = vdwg.mxu0
        %381 = vst [vmem:[%s173] sm:$0xff] %v306
        %382 = vst [vmem:[%s173 + $0x8] sm:$0xff] %v308
        %383 = vst [vmem:[%s173 + $0x10] sm:$0xff] %v377
        %384 = vst [vmem:[%s173 + $0x18] sm:$0xff] %v379
        %s385 = sand.u32 %s75, 1
        %s386 = scalar_lea.sflag [#allocation4], %s385
        %s387 = sand.u32 %s75, 1
        %s388 = smul.addr %s387, 32
        %s389 = scalar_lea.vmem [#allocation7], %s388
        // Predicated region
        $region37: #{tpu_custom_call.1} parent=27 // pred_check
          %p390 = pneg %p85
        $region38: #{tpu_custom_call.1} parent=27 // pred_check_branch
          %392 = sbr.rel (%p390) target = $region40
        $region39: #{tpu_custom_call.1} parent=27 // pred_region
          %s394 = ssub.s32 512, 512
          %395 = vsyncadd %s386, %s394
          %s396 = smul.addr %s20, 4
          %s397 = smul.addr %s396, 128
          %s398 = scalar_lea.hbm %s2, %s397
          %s400 = sshll.u32 %s389, 4
          %s401 = int_to_ptr.vmem [resolvable:$true] %s400
          %403 = dma.vmem_to_hbm [thread:$0]  %s401, 512, %s398, %s386
        $region40: #{tpu_custom_call.1} parent=27 // pred_fallthru
          _
      $region28: #{tpu_custom_call.1} parent=5 // pred_fallthru
        _
      %p404 = scmp.le.s32.totalorder 2, %s15
      // Predicated region
      $region41: #{tpu_custom_call.1} parent=5 // pred_check
        %p405 = pneg %p404
      $region42: #{tpu_custom_call.1} parent=5 // pred_check_branch
        %407 = sbr.rel (%p405) target = $region44
      $region43: #{tpu_custom_call.1} parent=5 // pred_region
        %s408 = ssub.s32 %s15, 2
        // Predicated region
        $region45: #{tpu_custom_call.1} parent=43 // pred_check
          %p409 = pneg %p91
        $region46: #{tpu_custom_call.1} parent=43 // pred_check_branch
          %411 = sbr.rel (%p409) target = $region48
        $region47: #{tpu_custom_call.1} parent=43 // pred_region
          %s412 = sand.u32 %s76, 1
          %s413 = scalar_lea.sflag [#allocation4], %s412
          %s414 = sand.u32 %s76, 1
          %s415 = smul.addr %s414, 32
          %s416 = scalar_lea.vmem [#allocation7], %s415
          %417 = dma.done %s413, 512
        $region48: #{tpu_custom_call.1} parent=43 // pred_fallthru
          _
      $region44: #{tpu_custom_call.1} parent=5 // pred_fallthru
        _
    $region6: #{tpu_custom_call.1} parent=1 // loop_footer
      %s19 = sadd.s32 1, %s15
    $region7: #{tpu_custom_call.1} parent=1 // loop_footer_branch
      %14 = sbr.rel target = $region3
    $region8: #{tpu_custom_call.1} parent=1 // loop_exit
      _
    %418 = vsyncpa [#allocation3], 1
    %s419 = scalar_lea.sflag [#allocation3], 1
    %420 = vsyncpa %s419, 1
    %421 = vsyncpa [#allocation6], 1
    %422 = vsyncpa [#allocation4], 1
    %s423 = scalar_lea.sflag [#allocation4], 1
    %424 = vsyncpa %s423, 1

</llo_original>
